<compile_context>
chip_gen: v7x
topology: tpu7x:2x2x1
jax: 0.10.0
libtpu: 0.0.40
codegen_flags: <defaults>
</compile_context>

<pallas_src>
import numpy as np
import jax
import jax.numpy as jnp
from jax.experimental import pallas as pl
from jax.experimental.pallas import tpu as pltpu

_SMOOTH = 0.01


def _round_up(a: int, b: int) -> int:
    return (a + b - 1) // b * b


def _make_kernel(n: int, m: int, tile_m: int, n_j: int):
    """Kernel closes over shapes only (no hyper-parameters)."""
    needs_mask = (m % tile_m) != 0

    def kernel(x_ref, t_ref, bce_out_ref, dice_out_ref, acc_bce, acc_dice):
        s = pl.program_id(0)   # parallel split over M (2-TC v7x win)
        j = pl.program_id(1)   # sequential reduction within the split

        @pl.when(j == 0)
        def _init():
            acc_bce[...] = jnp.zeros_like(acc_bce)
            acc_dice[...] = jnp.zeros_like(acc_dice)

        # Widen from native dtype in-register (inputs arrive bf16/f32 as given).
        x = x_ref[...].astype(jnp.float32)   # (N, TILE_M) logits
        t = t_ref[...].astype(jnp.float32)   # (N, TILE_M) targets

        # Numerically stable BCE-with-logits element:
        #   max(x,0) - x*t + log1p(exp(-|x|))
        bce_elem = jnp.maximum(x, 0.0) - x * t + jnp.log1p(jnp.exp(-jnp.abs(x)))

        # Dice element. With pf = (sigmoid(x) > 0.5) = (x > 0):
        #   i1 + i2 = M + sum(2*pf*t - pf - t), denominator = 2*M + smooth,
        # so a single per-row accumulator suffices.
        pf = (x > 0.0).astype(jnp.float32)
        dice_elem = 2.0 * pf * t - pf - t

        if needs_mask:
            # Last tile may be partial; zero contributions past column M.
            col0 = (s * n_j + j) * tile_m
            lane = jax.lax.broadcasted_iota(jnp.int32, (n, tile_m), 1)
            valid = lane < (m - col0)
            bce_elem = jnp.where(valid, bce_elem, 0.0)
            dice_elem = jnp.where(valid, dice_elem, 0.0)

        # Pure VPU element-wise accumulation (hides under the input DMA).
        acc_bce[...] += bce_elem
        acc_dice[...] += dice_elem

        @pl.when(j == n_j - 1)
        def _finalize():
            # Single cross-lane (XLU) reduction per split.
            bce_rows = jnp.sum(acc_bce[...], axis=1, keepdims=True)   # (N, 1)
            q_rows = jnp.sum(acc_dice[...], axis=1, keepdims=True)    # (N, 1)
            bce_out_ref[0] = jnp.broadcast_to(bce_rows, (n, 128))
            dice_out_ref[0] = jnp.broadcast_to(q_rows, (n, 128))

    return kernel


def bce_dice_loss(x, target, alpha: float = 0.5, beta: float = 0.5, tile_m=None):
    """x, target: (N, C, H, W) logits / targets. Returns scalar loss (float32)."""
    N = x.shape[0]
    M = int(np.prod(x.shape[1:]))

    # Contiguous (N, M) slabs in the inputs' native dtypes (no upcast pass over HBM).
    xf = jnp.reshape(x, (N, M))
    tf = jnp.reshape(target, (N, M))

    if tile_m is None:
        # VMEM per lane-column: 2 double-buffered inputs + 2 f32 accumulators, per row.
        itemsz = xf.dtype.itemsize + tf.dtype.itemsize
        bytes_per_col = N * (2 * itemsz + 2 * 4)
        # Stay well under the 32 MiB default scoped-VMEM limit (v7x-safe: 64 MiB total).
        tile_m = min(8192, max(128, (8 << 20) // max(1, bytes_per_col)))
    tile_m = max(128, min(_round_up(M, 128), (tile_m // 128) * 128))

    n_tiles = -(-M // tile_m)
    n_split = 2 if (n_tiles % 2 == 0) else 1   # 2-way core split when it divides evenly
    n_j = n_tiles // n_split

    kernel = _make_kernel(N, M, tile_m, n_j)

    bce_part, dice_part = pl.pallas_call(
        kernel,
        out_shape=(
            jax.ShapeDtypeStruct((n_split, N, 128), jnp.float32),
            jax.ShapeDtypeStruct((n_split, N, 128), jnp.float32),
        ),
        grid_spec=pltpu.PrefetchScalarGridSpec(
            num_scalar_prefetch=0,
            grid=(n_split, n_j),
            in_specs=[
                pl.BlockSpec((N, tile_m), lambda s, j: (0, s * n_j + j)),
                pl.BlockSpec((N, tile_m), lambda s, j: (0, s * n_j + j)),
            ],
            out_specs=(
                pl.BlockSpec((1, N, 128), lambda s, j: (s, 0, 0)),
                pl.BlockSpec((1, N, 128), lambda s, j: (s, 0, 0)),
            ),
            scratch_shapes=[
                pltpu.VMEM((N, tile_m), jnp.float32),   # BCE partial sums
                pltpu.VMEM((N, tile_m), jnp.float32),   # dice partial sums
            ],
        ),
        compiler_params=pltpu.CompilerParams(
            dimension_semantics=("parallel", "arbitrary")),
    )(xf, tf)

    # Tiny scalar combine in JAX (keeps alpha/beta and 1/(N*M) out of the kernel).
    bce_mean = jnp.sum(bce_part[:, :, 0]) / (N * M)
    q_rows = jnp.sum(dice_part[:, :, 0], axis=0)                      # (N,)
    dice_per = (2.0 * q_rows + 2.0 * M + _SMOOTH) / (2.0 * M + _SMOOTH)
    dice_loss = 1.0 - jnp.sum(dice_per) / N
    return (alpha * bce_mean + beta * dice_loss).astype(jnp.float32)


def _reference(x, target, alpha, beta):
    # Pure-JAX reference mirroring the PyTorch module.
    N = x.shape[0]
    xf = x.reshape(N, -1).astype(jnp.float32)
    tf = target.reshape(N, -1).astype(jnp.float32)
    bce = jnp.mean(jnp.maximum(xf, 0) - xf * tf + jnp.log1p(jnp.exp(-jnp.abs(xf))))
    pf = (jax.nn.sigmoid(xf) > 0.5).astype(jnp.float32)
    i1 = jnp.sum(pf * tf, axis=1)
    i2 = jnp.sum((1 - pf) * (1 - tf), axis=1)
    denom = (jnp.sum(pf, 1) + jnp.sum(1 - pf, 1) + jnp.sum(tf, 1)
             + jnp.sum(1 - tf, 1) + _SMOOTH)
    dice = 1.0 - jnp.sum((2 * (i1 + i2) + _SMOOTH) / denom) / N
    return alpha * bce + beta * dice


if __name__ == "__main__":
    # BCEDiceLoss(alpha, beta) has no learned parameters; alpha/beta are scalars.
    alpha, beta = 0.7, 0.3

    key = jax.random.PRNGKey(0)
    k1, k2 = jax.random.split(key)
    x = jax.random.normal(k1, (2, 4, 16, 16), dtype=jnp.float32)          # logits
    target = jax.random.bernoulli(k2, 0.5, (2, 4, 16, 16)).astype(jnp.float32)

    # tile_m=256 -> M=1024 flattened columns -> 4 tiles -> grid (2, 2):
    # exercises both the parallel split and the multi-step accumulation path.
    loss = bce_dice_loss(x, target, alpha, beta, tile_m=256)
    loss = jax.block_until_ready(loss)

    ref = _reference(x, target, alpha, beta)
    assert jnp.allclose(loss, ref, atol=1e-5, rtol=1e-5), (loss, ref)

    # Also check the auto-tile (single-tile-per-split) path.
    loss2 = jax.block_until_ready(bce_dice_loss(x, target, alpha, beta))
    assert jnp.allclose(loss2, ref, atol=1e-5, rtol=1e-5), (loss2, ref)

    print("KERNEL_OK")
</pallas_src>

<mosaic_0001>
module attributes {stable_mosaic.version = 11 : i64} {
  func.func @kernel(%arg0: i32, %arg1: i32, %arg2: memref<2x256xf32, #tpu.memory_space<vmem>>, %arg3: memref<2x256xf32, #tpu.memory_space<vmem>>, %arg4: memref<1x2x128xf32, #tpu.memory_space<vmem>>, %arg5: memref<1x2x128xf32, #tpu.memory_space<vmem>>, %arg6: memref<2x256xf32, #tpu.memory_space<vmem>>, %arg7: memref<2x256xf32, #tpu.memory_space<vmem>>) attributes {dimension_semantics = [#tpu.dimension_semantics<parallel>, #tpu.dimension_semantics<arbitrary>], iteration_bounds = array<i64: 2, 2>, scalar_prefetch = 0 : i64, scratch_operands = 2 : i64, tpu.core_type = #tpu.core_type<tc>, window_params = [{transform_indices = @transform_0, window_bounds = array<i64: 2, 256>}, {transform_indices = @transform_1, window_bounds = array<i64: 2, 256>}, {transform_indices = @transform_2, window_bounds = array<i64: 1, 2, 128>}, {transform_indices = @transform_3, window_bounds = array<i64: 1, 2, 128>}]} {
    %c0_i32 = arith.constant 0 : i32
    %0 = arith.cmpi eq, %arg1, %c0_i32 : i32
    %1 = arith.extui %0 : i1 to i32
    %c0_i32_0 = arith.constant 0 : i32
    %2 = arith.cmpi ne, %1, %c0_i32_0 : i32
    scf.if %2 {
      %cst_16 = arith.constant 0.000000e+00 : f32
      %33 = vector.broadcast %cst_16 : f32 to vector<2x256xf32>
      %c0_17 = arith.constant 0 : index
      %c0_18 = arith.constant 0 : index
      %34 = vector.load %arg6[%c0_17, %c0_18] : memref<2x256xf32, #tpu.memory_space<vmem>>, vector<2x256xf32>
      tpu.vector_store %arg6[%c0_17, %c0_18], %33 {strides = array<i32>} : memref<2x256xf32, #tpu.memory_space<vmem>>, vector<2x256xf32>,
      %cst_19 = arith.constant 0.000000e+00 : f32
      %35 = vector.broadcast %cst_19 : f32 to vector<2x256xf32>
      %c0_20 = arith.constant 0 : index
      %c0_21 = arith.constant 0 : index
      %36 = vector.load %arg7[%c0_20, %c0_21] : memref<2x256xf32, #tpu.memory_space<vmem>>, vector<2x256xf32>
      tpu.vector_store %arg7[%c0_20, %c0_21], %35 {strides = array<i32>} : memref<2x256xf32, #tpu.memory_space<vmem>>, vector<2x256xf32>,
    } else {
    }
    %c0 = arith.constant 0 : index
    %c0_1 = arith.constant 0 : index
    %3 = vector.load %arg2[%c0, %c0_1] : memref<2x256xf32, #tpu.memory_space<vmem>>, vector<2x256xf32>
    %c0_2 = arith.constant 0 : index
    %c0_3 = arith.constant 0 : index
    %4 = vector.load %arg3[%c0_2, %c0_3] : memref<2x256xf32, #tpu.memory_space<vmem>>, vector<2x256xf32>
    %cst = arith.constant 0.000000e+00 : f32
    %5 = vector.broadcast %cst : f32 to vector<2x256xf32>
    %6 = arith.maximumf %3, %5 : vector<2x256xf32>
    %7 = arith.mulf %3, %4 : vector<2x256xf32>
    %8 = arith.subf %6, %7 : vector<2x256xf32>
    %9 = math.absf %3 : vector<2x256xf32>
    %cst_4 = arith.constant 0.000000e+00 : f32
    %10 = vector.broadcast %cst_4 : f32 to vector<2x256xf32>
    %11 = arith.subf %10, %9 : vector<2x256xf32>
    %12 = math.exp %11 : vector<2x256xf32>
    %13 = math.log1p %12 : vector<2x256xf32>
    %14 = arith.addf %8, %13 : vector<2x256xf32>
    %cst_5 = arith.constant 0.000000e+00 : f32
    %15 = vector.broadcast %cst_5 : f32 to vector<2x256xf32>
    %16 = arith.cmpf ogt, %3, %15 : vector<2x256xf32>
    %17 = arith.extui %16 : vector<2x256xi1> to vector<2x256xi32>
    %18 = arith.sitofp %17 : vector<2x256xi32> to vector<2x256xf32>
    %cst_6 = arith.constant 2.000000e+00 : f32
    %19 = vector.broadcast %cst_6 : f32 to vector<2x256xf32>
    %20 = arith.mulf %19, %18 : vector<2x256xf32>
    %21 = arith.mulf %20, %4 : vector<2x256xf32>
    %22 = arith.subf %21, %18 : vector<2x256xf32>
    %23 = arith.subf %22, %4 : vector<2x256xf32>
    %c0_7 = arith.constant 0 : index
    %c0_8 = arith.constant 0 : index
    %24 = vector.load %arg6[%c0_7, %c0_8] : memref<2x256xf32, #tpu.memory_space<vmem>>, vector<2x256xf32>
    %25 = arith.addf %24, %14 : vector<2x256xf32>
    %c0_9 = arith.constant 0 : index
    %c0_10 = arith.constant 0 : index
    %26 = vector.load %arg6[%c0_9, %c0_10] : memref<2x256xf32, #tpu.memory_space<vmem>>, vector<2x256xf32>
    tpu.vector_store %arg6[%c0_9, %c0_10], %25 {strides = array<i32>} : memref<2x256xf32, #tpu.memory_space<vmem>>, vector<2x256xf32>,
    %c0_11 = arith.constant 0 : index
    %c0_12 = arith.constant 0 : index
    %27 = vector.load %arg7[%c0_11, %c0_12] : memref<2x256xf32, #tpu.memory_space<vmem>>, vector<2x256xf32>
    %28 = arith.addf %27, %23 : vector<2x256xf32>
    %c0_13 = arith.constant 0 : index
    %c0_14 = arith.constant 0 : index
    %29 = vector.load %arg7[%c0_13, %c0_14] : memref<2x256xf32, #tpu.memory_space<vmem>>, vector<2x256xf32>
    tpu.vector_store %arg7[%c0_13, %c0_14], %28 {strides = array<i32>} : memref<2x256xf32, #tpu.memory_space<vmem>>, vector<2x256xf32>,
    %c1_i32 = arith.constant 1 : i32
    %30 = arith.cmpi eq, %arg1, %c1_i32 : i32
    %31 = arith.extui %30 : i1 to i32
    %c0_i32_15 = arith.constant 0 : i32
    %32 = arith.cmpi ne, %31, %c0_i32_15 : i32
    scf.if %32 {
      %c0_16 = arith.constant 0 : index
      %c0_17 = arith.constant 0 : index
      %33 = vector.load %arg6[%c0_16, %c0_17] : memref<2x256xf32, #tpu.memory_space<vmem>>, vector<2x256xf32>
      %cst_18 = arith.constant dense<0.000000e+00> : vector<2xf32>
      %34 = vector.multi_reduction <add>, %33, %cst_18 [1] : vector<2x256xf32> to vector<2xf32>
      %35 = vector.shape_cast %34 : vector<2xf32> to vector<2x1xf32>
      %c0_19 = arith.constant 0 : index
      %c0_20 = arith.constant 0 : index
      %36 = vector.load %arg7[%c0_19, %c0_20] : memref<2x256xf32, #tpu.memory_space<vmem>>, vector<2x256xf32>
      %cst_21 = arith.constant dense<0.000000e+00> : vector<2xf32>
      %37 = vector.multi_reduction <add>, %36, %cst_21 [1] : vector<2x256xf32> to vector<2xf32>
      %38 = vector.shape_cast %37 : vector<2xf32> to vector<2x1xf32>
      %39 = vector.shape_cast %35 : vector<2x1xf32> to vector<2x1xf32>
      %40 = vector.broadcast %39 : vector<2x1xf32> to vector<2x128xf32>
      %c0_22 = arith.constant 0 : index
      %c0_23 = arith.constant 0 : index
      %c0_24 = arith.constant 0 : index
      %41 = vector.load %arg4[%c0_22, %c0_23, %c0_24] : memref<1x2x128xf32, #tpu.memory_space<vmem>>, vector<1x2x128xf32>
      %42 = vector.shape_cast %41 : vector<1x2x128xf32> to vector<2x128xf32>
      %43 = vector.shape_cast %40 : vector<2x128xf32> to vector<1x2x128xf32>
      tpu.vector_store %arg4[%c0_22, %c0_23, %c0_24], %43 {strides = array<i32>} : memref<1x2x128xf32, #tpu.memory_space<vmem>>, vector<1x2x128xf32>,
      %44 = vector.shape_cast %38 : vector<2x1xf32> to vector<2x1xf32>
      %45 = vector.broadcast %44 : vector<2x1xf32> to vector<2x128xf32>
      %c0_25 = arith.constant 0 : index
      %c0_26 = arith.constant 0 : index
      %c0_27 = arith.constant 0 : index
      %46 = vector.load %arg5[%c0_25, %c0_26, %c0_27] : memref<1x2x128xf32, #tpu.memory_space<vmem>>, vector<1x2x128xf32>
      %47 = vector.shape_cast %46 : vector<1x2x128xf32> to vector<2x128xf32>
      %48 = vector.shape_cast %45 : vector<2x128xf32> to vector<1x2x128xf32>
      tpu.vector_store %arg5[%c0_25, %c0_26, %c0_27], %48 {strides = array<i32>} : memref<1x2x128xf32, #tpu.memory_space<vmem>>, vector<1x2x128xf32>,
    } else {
    }
    return
  }
  func.func @transform_0(%arg0: i32, %arg1: i32) -> (i32, i32) {
    %c2_i32 = arith.constant 2 : i32
    %0 = arith.muli %arg0, %c2_i32 : i32
    %1 = arith.addi %0, %arg1 : i32
    %c0_i32 = arith.constant 0 : i32
    %c0_i32_0 = arith.constant 0 : i32
    return %c0_i32, %1 : i32, i32
  }
  func.func @transform_1(%arg0: i32, %arg1: i32) -> (i32, i32) {
    %c2_i32 = arith.constant 2 : i32
    %0 = arith.muli %arg0, %c2_i32 : i32
    %1 = arith.addi %0, %arg1 : i32
    %c0_i32 = arith.constant 0 : i32
    %c0_i32_0 = arith.constant 0 : i32
    return %c0_i32, %1 : i32, i32
  }
  func.func @transform_2(%arg0: i32, %arg1: i32) -> (i32, i32, i32) {
    %c0_i32 = arith.constant 0 : i32
    %c0_i32_0 = arith.constant 0 : i32
    %c0_i32_1 = arith.constant 0 : i32
    return %arg0, %c0_i32, %c0_i32_0 : i32, i32, i32
  }
  func.func @transform_3(%arg0: i32, %arg1: i32) -> (i32, i32, i32) {
    %c0_i32 = arith.constant 0 : i32
    %c0_i32_0 = arith.constant 0 : i32
    %c0_i32_1 = arith.constant 0 : i32
    return %arg0, %c0_i32, %c0_i32_0 : i32, i32, i32
  }
}

</mosaic_0001>

<llo_original>
// kernel: tpu_custom_call.1
$region0: #{tpu_custom_call.1}
  #allocation0 [shape = 'u32[]', space=smem, size = 0x4, offset = 0x4, fixed_abs, tag = 'smem constant byte address 0x4 - core index']
  #allocation1 [shape = 'u32[144,128]{1,0:T(1,128)}', space=vmem, size = 0x12000, scoped, tag = 'internal scratch']
  #allocation2 [shape = 'f32[2,256]{1,0:T(2,128)}', space=vmem, size = 0x800, scoped, tag = 'scratch operand']
  #allocation3 [shape = 'f32[2,256]{1,0:T(2,128)}', space=vmem, size = 0x800, scoped, tag = 'scratch operand']
  %s0 = inlined_call_operand.hbm [shape: f32[2,1024], index: 0, kind: input, shape index: {}]
  %s1 = inlined_call_operand.hbm [shape: f32[2,1024], index: 1, kind: input, shape index: {}]
  %s2 = inlined_call_operand.hbm [shape: f32[2,2,128], index: 2, kind: output, shape index: {0}]
  %s3 = inlined_call_operand.hbm [shape: f32[2,2,128], index: 3, kind: output, shape index: {1}]
  %4 = xla_tuple %s2, %s3
  %s5 = sld [smem:[#allocation0]]
  $region65: #{tpu_custom_call.1} parent=0
    _
  %s7 = ssub.s32 1, %s5
  %s8 = scalar_select 0, %s7, %s5
  $region1: #{tpu_custom_call.1} parent=0
    #allocation4 [shape = 'u8[4096]{0}', space=vmem, size = 0x1000, scoped, tag = 'input window, operand 0']
    #allocation5 [shape = 's32[2]{0}', space=sflag, size = 0x8, scoped, tag = 'scoped memory for tpu_custom_call.1']
    #allocation6 [shape = 's32[2]{0}', space=sflag, size = 0x8, scoped, tag = 'scoped memory for tpu_custom_call.1']
    #allocation7 [shape = 'u8[4096]{0}', space=vmem, size = 0x1000, scoped, tag = 'input window, operand 1']
    #allocation8 [shape = 's32[2]{0}', space=sflag, size = 0x8, scoped, tag = 'scoped memory for tpu_custom_call.1']
    #allocation9 [shape = 'u8[2048]{0}', space=vmem, size = 0x800, scoped, tag = 'output window, operand 0']
    #allocation10 [shape = 'u8[2048]{0}', space=vmem, size = 0x800, scoped, tag = 'output window, operand 1']
    #allocation11 [shape = 's32[2]{0}', space=sflag, size = 0x8, scoped, tag = 'scoped memory for tpu_custom_call.1']
    %9 = vsyncpa [#allocation5], 0
    %s10 = scalar_lea.sflag [#allocation5], 1
    %11 = vsyncpa %s10, 0
    %12 = vsyncpa [#allocation8], 0
    %s13 = scalar_lea.sflag [#allocation8], 1
    %14 = vsyncpa %s13, 0
    %15 = vsyncpa [#allocation6], 0
    %s16 = scalar_lea.sflag [#allocation6], 1
    %17 = vsyncpa %s16, 0
    %18 = vsyncpa [#allocation11], 0
    %s19 = scalar_lea.sflag [#allocation11], 1
    %20 = vsyncpa %s19, 0
    loop: start=0, step=1, limit=6
    $region2: #{tpu_custom_call.1} parent=1 // loop_pre_header
      _
    $region3: #{tpu_custom_call.1} parent=1 // loop_header
      %s22 = sphi 0, %s26
      %p23 = scmp.ge.s32.totalorder %s22, 6
      %s29 = sphi 0, %s41
      %s30 = sphi 0, %s37
      %s31 = sphi 0, %s29
      %s32 = sphi 0, %s30
      %s33 = sphi 0, %s31
      %s34 = sphi 0, %s32
      %s48 = sphi 0, %s50
      %s51 = sphi 0, %s48
      %s52 = sphi 0, %s51
      %s68 = sphi 0, %s52
      %s78 = sphi 0, %s80
      %s81 = sphi 0, %s78
      %s82 = sphi 0, %s81
      %s98 = sphi 0, %s82
      %s104 = sphi 0, %s106
      %s107 = sphi 0, %s104
      %s108 = sphi 0, %s107
      %s124 = sphi 0, %s108
      %s130 = sphi 0, %s132
      %s133 = sphi 0, %s130
      %s134 = sphi 0, %s133
      %s150 = sphi 0, %s134
    $region4: #{tpu_custom_call.1} parent=1 // loop_header_branch
      %25 = sbr.rel (%p23) target = $region8
    $region5: #{tpu_custom_call.1} parent=1 // loop_body
      %s27 = ssub.s32 %s22, 1
      %s28 = ssub.s32 %s22, 2
      %s35 = sadd.s32 1, %s30
      %p36 = scmp.ge.s32.totalorder %s35, 2
      %s37 = scalar_select %p36, 0, %s35
      %s38 = sadd.s32 1, %s29
      %s39 = scalar_select %p36, %s38, %s29
      %p40 = scmp.ge.s32.totalorder %s39, 2
      %s41 = scalar_select %p40, 0, %s39
      %s42 = smul.u32 %s29, 2
      %s43 = sadd.s32 %s42, %s30
      %s44 = smul.u32 %s41, 2
      %s45 = sadd.s32 %s44, %s37
      %s46 = ssub.s32 %s43, %s45
      %p47 = scmp.eq.s32.totalorder %s46, 0
      %s49 = sadd.s32 %s48, 1
      %s50 = scalar_select %p47, %s48, %s49
      %p53 = pneg %p47
      %p54 = scmp.eq.s32.totalorder %s22, 3
      %p55 = por %p53, %p54
      %p56 = scmp.ne.s32.totalorder %s48, %s51
      %p57 = scmp.eq.s32.totalorder %s22, 0
      %p58 = por %p56, %p57
      %p59 = scmp.ne.s32.totalorder %s48, %s51
      %p60 = scmp.eq.s32.totalorder %s27, 3
      %p61 = por %p59, %p60
      %p62 = scmp.ne.s32.totalorder %s51, %s52
      %p63 = scmp.eq.s32.totalorder %s27, 0
      %p64 = por %p62, %p63
      %p65 = scmp.ne.s32.totalorder %s51, %s52
      %p66 = scmp.eq.s32.totalorder %s28, 3
      %p67 = por %p65, %p66
      %p69 = scmp.ne.s32.totalorder %s52, %s68
      %p70 = scmp.eq.s32.totalorder %s28, 0
      %p71 = por %p69, %p70
      %s72 = smul.u32 %s29, 2
      %s73 = sadd.s32 %s72, %s30
      %s74 = smul.u32 %s41, 2
      %s75 = sadd.s32 %s74, %s37
      %s76 = ssub.s32 %s73, %s75
      %p77 = scmp.eq.s32.totalorder %s76, 0
      %s79 = sadd.s32 %s78, 1
      %s80 = scalar_select %p77, %s78, %s79
      %p83 = pneg %p77
      %p84 = scmp.eq.s32.totalorder %s22, 3
      %p85 = por %p83, %p84
      %p86 = scmp.ne.s32.totalorder %s78, %s81
      %p87 = scmp.eq.s32.totalorder %s22, 0
      %p88 = por %p86, %p87
      %p89 = scmp.ne.s32.totalorder %s78, %s81
      %p90 = scmp.eq.s32.totalorder %s27, 3
      %p91 = por %p89, %p90
      %p92 = scmp.ne.s32.totalorder %s81, %s82
      %p93 = scmp.eq.s32.totalorder %s27, 0
      %p94 = por %p92, %p93
      %p95 = scmp.ne.s32.totalorder %s81, %s82
      %p96 = scmp.eq.s32.totalorder %s28, 3
      %p97 = por %p95, %p96
      %p99 = scmp.ne.s32.totalorder %s82, %s98
      %p100 = scmp.eq.s32.totalorder %s28, 0
      %p101 = por %p99, %p100
      %s102 = ssub.s32 %s29, %s41
      %p103 = scmp.eq.s32.totalorder %s102, 0
      %s105 = sadd.s32 %s104, 1
      %s106 = scalar_select %p103, %s104, %s105
      %p109 = pneg %p103
      %p110 = scmp.eq.s32.totalorder %s22, 3
      %p111 = por %p109, %p110
      %p112 = scmp.ne.s32.totalorder %s104, %s107
      %p113 = scmp.eq.s32.totalorder %s22, 0
      %p114 = por %p112, %p113
      %p115 = scmp.ne.s32.totalorder %s104, %s107
      %p116 = scmp.eq.s32.totalorder %s27, 3
      %p117 = por %p115, %p116
      %p118 = scmp.ne.s32.totalorder %s107, %s108
      %p119 = scmp.eq.s32.totalorder %s27, 0
      %p120 = por %p118, %p119
      %p121 = scmp.ne.s32.totalorder %s107, %s108
      %p122 = scmp.eq.s32.totalorder %s28, 3
      %p123 = por %p121, %p122
      %p125 = scmp.ne.s32.totalorder %s108, %s124
      %p126 = scmp.eq.s32.totalorder %s28, 0
      %p127 = por %p125, %p126
      %s128 = ssub.s32 %s29, %s41
      %p129 = scmp.eq.s32.totalorder %s128, 0
      %s131 = sadd.s32 %s130, 1
      %s132 = scalar_select %p129, %s130, %s131
      %p135 = pneg %p129
      %p136 = scmp.eq.s32.totalorder %s22, 3
      %p137 = por %p135, %p136
      %p138 = scmp.ne.s32.totalorder %s130, %s133
      %p139 = scmp.eq.s32.totalorder %s22, 0
      %p140 = por %p138, %p139
      %p141 = scmp.ne.s32.totalorder %s130, %s133
      %p142 = scmp.eq.s32.totalorder %s27, 3
      %p143 = por %p141, %p142
      %p144 = scmp.ne.s32.totalorder %s133, %s134
      %p145 = scmp.eq.s32.totalorder %s27, 0
      %p146 = por %p144, %p145
      %p147 = scmp.ne.s32.totalorder %s133, %s134
      %p148 = scmp.eq.s32.totalorder %s28, 3
      %p149 = por %p147, %p148
      %p151 = scmp.ne.s32.totalorder %s134, %s150
      %p152 = scmp.eq.s32.totalorder %s28, 0
      %p153 = por %p151, %p152
      %p154 = scmp.le.s32.totalorder 1, %s22
      %p155 = scmp.lt.s32.totalorder %s22, 5
      %p156 = pnand %p154, %p155
      %p157 = pneg %p156
      // Predicated region
      $region9: #{tpu_custom_call.1} parent=5 // pred_check
        _
      $region10: #{tpu_custom_call.1} parent=5 // pred_check_branch
        %159 = sbr.rel (%p156) target = $region12
      $region11: #{tpu_custom_call.1} parent=5 // pred_region
        %s160 = ssub.s32 %s22, 1
      $region12: #{tpu_custom_call.1} parent=5 // pred_fallthru
        _
      %p161 = scmp.lt.s32.totalorder %s22, 4
      // Predicated region
      $region13: #{tpu_custom_call.1} parent=5 // pred_check
        %p162 = pneg %p161
      $region14: #{tpu_custom_call.1} parent=5 // pred_check_branch
        %164 = sbr.rel (%p162) target = $region16
      $region15: #{tpu_custom_call.1} parent=5 // pred_region
        // Predicated region
        $region17: #{tpu_custom_call.1} parent=15 // pred_check
          %p165 = pneg %p58
        $region18: #{tpu_custom_call.1} parent=15 // pred_check_branch
          %167 = sbr.rel (%p165) target = $region20
        $region19: #{tpu_custom_call.1} parent=15 // pred_region
          %s168 = sand.u32 %s48, 1
          %s169 = scalar_lea.sflag [#allocation5], %s168
          %s170 = sand.u32 %s48, 1
          %s171 = smul.addr %s170, 4
          %s172 = scalar_lea.vmem [#allocation4], %s171
          %s173 = smul.u32 %s29, 2
          %s174 = sadd.s32 %s173, %s30
          %s175 = smul.u32 2, %s174
          %s177 = ssub.s32 64, 64
          %178 = vsyncadd %s169, %s177
          %s179 = smul.addr %s175, 32
          %s180 = scalar_lea.hbm %s0, %s179
          %s182 = sshll.u32 %s172, 4
          %s183 = int_to_ptr.vmem [resolvable:$true] %s182
          %185 = dma.hbm_to_vmem [thread:$0]  %s180, 64, %s183, %s169
        $region20: #{tpu_custom_call.1} parent=15 // pred_fallthru
          _
        // Predicated region
        $region21: #{tpu_custom_call.1} parent=15 // pred_check
          %p186 = pneg %p88
        $region22: #{tpu_custom_call.1} parent=15 // pred_check_branch
          %188 = sbr.rel (%p186) target = $region24
        $region23: #{tpu_custom_call.1} parent=15 // pred_region
          %s189 = sand.u32 %s78, 1
          %s190 = scalar_lea.sflag [#allocation8], %s189
          %s191 = sand.u32 %s78, 1
          %s192 = smul.addr %s191, 4
          %s193 = scalar_lea.vmem [#allocation7], %s192
          %s194 = smul.u32 %s29, 2
          %s195 = sadd.s32 %s194, %s30
          %s196 = smul.u32 2, %s195
          %s198 = ssub.s32 64, 64
          %199 = vsyncadd %s190, %s198
          %s200 = smul.addr %s196, 32
          %s201 = scalar_lea.hbm %s1, %s200
          %s203 = sshll.u32 %s193, 4
          %s204 = int_to_ptr.vmem [resolvable:$true] %s203
          %206 = dma.hbm_to_vmem [thread:$0]  %s201, 64, %s204, %s190
        $region24: #{tpu_custom_call.1} parent=15 // pred_fallthru
          _
      $region16: #{tpu_custom_call.1} parent=5 // pred_fallthru
        _
      %p207 = scmp.le.s32.totalorder 1, %s22
      %p208 = scmp.lt.s32.totalorder %s22, 5
      %p209 = pnand %p207, %p208
      %p210 = pneg %p209
      // Predicated region
      $region25: #{tpu_custom_call.1} parent=5 // pred_check
        _
      $region26: #{tpu_custom_call.1} parent=5 // pred_check_branch
        %212 = sbr.rel (%p209) target = $region28
      $region27: #{tpu_custom_call.1} parent=5 // pred_region
        %s213 = ssub.s32 %s22, 1
        %s214 = sand.u32 %s51, 1
        %s215 = scalar_lea.sflag [#allocation5], %s214
        %s216 = sand.u32 %s51, 1
        %s217 = smul.addr %s216, 4
        %s218 = scalar_lea.vmem [#allocation4], %s217
        // Predicated region
        $region29: #{tpu_custom_call.1} parent=27 // pred_check
          %p219 = pneg %p64
        $region30: #{tpu_custom_call.1} parent=27 // pred_check_branch
          %221 = sbr.rel (%p219) target = $region32
        $region31: #{tpu_custom_call.1} parent=27 // pred_region
          %222 = dma.done %s215, 64
        $region32: #{tpu_custom_call.1} parent=27 // pred_fallthru
          _
        %s223 = sand.u32 %s81, 1
        %s224 = scalar_lea.sflag [#allocation8], %s223
        %s225 = sand.u32 %s81, 1
        %s226 = smul.addr %s225, 4
        %s227 = scalar_lea.vmem [#allocation7], %s226
        // Predicated region
        $region33: #{tpu_custom_call.1} parent=27 // pred_check
          %p228 = pneg %p94
        $region34: #{tpu_custom_call.1} parent=27 // pred_check_branch
          %230 = sbr.rel (%p228) target = $region36
        $region35: #{tpu_custom_call.1} parent=27 // pred_region
          %231 = dma.done %s224, 64
        $region36: #{tpu_custom_call.1} parent=27 // pred_fallthru
          _
        %s232 = sand.u32 %s51, 1
        %s233 = scalar_lea.sflag [#allocation5], %s232
        %s234 = sand.u32 %s51, 1
        %s235 = smul.addr %s234, 4
        %s236 = scalar_lea.vmem [#allocation4], %s235
        %p237 = pneg %p64
        %p238 = pneg %p61
        %s239 = sand.u32 %s81, 1
        %s240 = scalar_lea.sflag [#allocation8], %s239
        %s241 = sand.u32 %s81, 1
        %s242 = smul.addr %s241, 4
        %s243 = scalar_lea.vmem [#allocation7], %s242
        %p244 = pneg %p94
        %p245 = pneg %p91
        %p246 = pneg %p120
        %p247 = pneg %p117
        %s248 = sand.u32 %s107, 1
        %s249 = scalar_lea.sflag [#allocation6], %s248
        %s250 = sand.u32 %s107, 1
        %s251 = smul.addr %s250, 2
        %s252 = scalar_lea.vmem [#allocation9], %s251
        %p253 = pneg %p146
        %p254 = pneg %p143
        %s255 = sand.u32 %s133, 1
        %s256 = scalar_lea.sflag [#allocation11], %s255
        %s257 = sand.u32 %s133, 1
        %s258 = smul.addr %s257, 2
        %s259 = scalar_lea.vmem [#allocation10], %s258
        %s260 = smul.u32 %s31, 2
        %s261 = sadd.s32 %s260, %s32
        %s262 = smul.u32 2, %s261
        %s263 = smul.u32 %s31, 2
        %s264 = sadd.s32 %s263, %s32
        %s265 = smul.u32 2, %s264
        %p266 = scmp.eq.s32.totalorder %s32, 0
        // Predicated region
        $region37: #{tpu_custom_call.1} parent=27 // pred_check
          %p267 = pneg %p266
        $region38: #{tpu_custom_call.1} parent=27 // pred_check_branch
          %269 = sbr.rel (%p267) target = $region40
        $region39: #{tpu_custom_call.1} parent=27 // pred_region
          %270 = vst [vmem:[#allocation2] sm:$0xf] 0.0
          %271 = vst [vmem:[#allocation3] sm:$0xf] 0.0
        $region40: #{tpu_custom_call.1} parent=27 // pred_fallthru
          _
        %v272 = vld [vmem:[%s218] sm:$0xf]
        %v273 = vld [vmem:[%s227] sm:$0xf]
        %v274 = vmax.f32 %v272, 0.0
        %v275 = vmul.f32 %v272, %v273
        %v276 = vsub.f32 %v274, %v275
        %v277 = vand.u32 2147483647, %v272
        %v278 = vsub.f32 0.0, %v277
        %v279 = vmul.f32 %v278, 1.442695
        %v280 = vpow.pop %v279
        %v281 = vadd.f32 %v280, 1.0
        %v282 = vlog2.pop %v281
        %v283 = vmul.f32 %v282, 0.6931472
        %v284 = vmul.f32 -0.5, %v280
        %v285 = vadd.f32 %v284, 1.0
        %v286 = vmul.f32 %v285, %v280
        %v287 = vand.u32 2147483647, %v280
        %vm288 = vcmp.lt.f32.partialorder %v287, 0.0004427343
        %v289 = vsel %vm288, %v286, %v283
        %v290 = vadd.f32 %v276, %v289
        %vm291 = vcmp.gt.f32.partialorder %v272, 0.0
        %v292 = vsel %vm291, 1, 0
        %v293 = vcvt.s32.f32 %v292
        %v294 = vmul.f32 %v293, 2.0
        %v295 = vmul.f32 %v294, %v273
        %v296 = vsub.f32 %v295, %v293
        %v297 = vsub.f32 %v296, %v273
        %v298 = vld [vmem:[#allocation2] sm:$0xf]
        %v299 = vadd.f32 %v298, %v290
        %300 = vst [vmem:[#allocation2] sm:$0xf] %v299
        %v301 = vld [vmem:[#allocation3] sm:$0xf]
        %v302 = vadd.f32 %v301, %v297
        %303 = vst [vmem:[#allocation3] sm:$0xf] %v302
        %p304 = scmp.eq.s32.totalorder %s32, 1
        // Predicated region
        $region41: #{tpu_custom_call.1} parent=27 // pred_check
          %p305 = pneg %p304
        $region42: #{tpu_custom_call.1} parent=27 // pred_check_branch
          %307 = sbr.rel (%p305) target = $region44
        $region43: #{tpu_custom_call.1} parent=27 // pred_region
          %v308 = vld [vmem:[#allocation2] sm:$0xf]
          %v311 = vunpack.c.l.s4 1983009808
          %v312 = vunpack.c.0.s8 %v311
          %v313 = vlaneseq
          %v314 = vshrl.u32 %v313, 7
          %v315 = vsub.s32 %v312, %v314
          %v316 = vrot.slane %v308, %v315
          %v317 = vcombine.high %v316, %v316
          %vm320 = vcmask 1041408
          %v321 = vsel %vm320, %v316, 0.0
          %v322 = vsel %vm320, %v317, 0.0
          %v323 = vadd.f32 %v321, %v322
          %324 = vadd.xlane.f32.xlu0 %v323
          %v325 = vpop.xlane.xlu0 %324
          %v326 = vld [vmem:[#allocation3] sm:$0xf]
          %v329 = vunpack.c.l.s4 1983009808
          %v330 = vunpack.c.0.s8 %v329
          %v331 = vlaneseq
          %v332 = vshrl.u32 %v331, 7
          %v333 = vsub.s32 %v330, %v332
          %v334 = vrot.slane %v326, %v333
          %v335 = vcombine.high %v334, %v334
          %v338 = vsel %vm320, %v334, 0.0
          %v339 = vsel %vm320, %v335, 0.0
          %v340 = vadd.f32 %v338, %v339
          %341 = vadd.xlane.f32.xlu0 %v340
          %v342 = vpop.xlane.xlu0 %341
          %343 = vst [vmem:[%s252] sm:$0x3] %v325
          %344 = vst [vmem:[%s259] sm:$0x3] %v342
        $region44: #{tpu_custom_call.1} parent=27 // pred_fallthru
          _
        %s345 = sand.u32 %s107, 1
        %s346 = scalar_lea.sflag [#allocation6], %s345
        %s347 = sand.u32 %s107, 1
        %s348 = smul.addr %s347, 2
        %s349 = scalar_lea.vmem [#allocation9], %s348
        %s350 = sand.u32 %s133, 1
        %s351 = scalar_lea.sflag [#allocation11], %s350
        %s352 = sand.u32 %s133, 1
        %s353 = smul.addr %s352, 2
        %s354 = scalar_lea.vmem [#allocation10], %s353
        // Predicated region
        $region45: #{tpu_custom_call.1} parent=27 // pred_check
          %p355 = pneg %p117
        $region46: #{tpu_custom_call.1} parent=27 // pred_check_branch
          %357 = sbr.rel (%p355) target = $region48
        $region47: #{tpu_custom_call.1} parent=27 // pred_region
          %s359 = ssub.s32 32, 32
          %360 = vsyncadd %s346, %s359
          %s361 = smul.addr %s31, 32
          %s362 = scalar_lea.hbm %s2, %s361
          %s364 = sshll.u32 %s349, 4
          %s365 = int_to_ptr.vmem [resolvable:$true] %s364
          %367 = dma.vmem_to_hbm [thread:$0]  %s365, 32, %s362, %s346
        $region48: #{tpu_custom_call.1} parent=27 // pred_fallthru
          _
        // Predicated region
        $region49: #{tpu_custom_call.1} parent=27 // pred_check
          %p368 = pneg %p143
        $region50: #{tpu_custom_call.1} parent=27 // pred_check_branch
          %370 = sbr.rel (%p368) target = $region52
        $region51: #{tpu_custom_call.1} parent=27 // pred_region
          %s372 = ssub.s32 32, 32
          %373 = vsyncadd %s351, %s372
          %s374 = smul.addr %s31, 32
          %s375 = scalar_lea.hbm %s3, %s374
          %s377 = sshll.u32 %s354, 4
          %s378 = int_to_ptr.vmem [resolvable:$true] %s377
          %380 = dma.vmem_to_hbm [thread:$0]  %s378, 32, %s375, %s351
        $region52: #{tpu_custom_call.1} parent=27 // pred_fallthru
          _
      $region28: #{tpu_custom_call.1} parent=5 // pred_fallthru
        _
      %p381 = scmp.le.s32.totalorder 2, %s22
      // Predicated region
      $region53: #{tpu_custom_call.1} parent=5 // pred_check
        %p382 = pneg %p381
      $region54: #{tpu_custom_call.1} parent=5 // pred_check_branch
        %384 = sbr.rel (%p382) target = $region56
      $region55: #{tpu_custom_call.1} parent=5 // pred_region
        %s385 = ssub.s32 %s22, 2
        // Predicated region
        $region57: #{tpu_custom_call.1} parent=55 // pred_check
          %p386 = pneg %p123
        $region58: #{tpu_custom_call.1} parent=55 // pred_check_branch
          %388 = sbr.rel (%p386) target = $region60
        $region59: #{tpu_custom_call.1} parent=55 // pred_region
          %s389 = sand.u32 %s108, 1
          %s390 = scalar_lea.sflag [#allocation6], %s389
          %s391 = sand.u32 %s108, 1
          %s392 = smul.addr %s391, 2
          %s393 = scalar_lea.vmem [#allocation9], %s392
          %394 = dma.done %s390, 32
        $region60: #{tpu_custom_call.1} parent=55 // pred_fallthru
          _
        // Predicated region
        $region61: #{tpu_custom_call.1} parent=55 // pred_check
          %p395 = pneg %p149
        $region62: #{tpu_custom_call.1} parent=55 // pred_check_branch
          %397 = sbr.rel (%p395) target = $region64
        $region63: #{tpu_custom_call.1} parent=55 // pred_region
          %s398 = sand.u32 %s134, 1
          %s399 = scalar_lea.sflag [#allocation11], %s398
          %s400 = sand.u32 %s134, 1
          %s401 = smul.addr %s400, 2
          %s402 = scalar_lea.vmem [#allocation10], %s401
          %403 = dma.done %s399, 32
        $region64: #{tpu_custom_call.1} parent=55 // pred_fallthru
          _
      $region56: #{tpu_custom_call.1} parent=5 // pred_fallthru
        _
    $region6: #{tpu_custom_call.1} parent=1 // loop_footer
      %s26 = sadd.s32 1, %s22
    $region7: #{tpu_custom_call.1} parent=1 // loop_footer_branch
      %21 = sbr.rel target = $region3
    $region8: #{tpu_custom_call.1} parent=1 // loop_exit
      _
    %404 = vsyncpa [#allocation5], 1
    %s405 = scalar_lea.sflag [#allocation5], 1
    %406 = vsyncpa %s405, 1
    %407 = vsyncpa [#allocation8], 1
    %s408 = scalar_lea.sflag [#allocation8], 1
    %409 = vsyncpa %s408, 1
    %410 = vsyncpa [#allocation6], 1
    %s411 = scalar_lea.sflag [#allocation6], 1
    %412 = vsyncpa %s411, 1
    %413 = vsyncpa [#allocation11], 1
    %s414 = scalar_lea.sflag [#allocation11], 1
    %415 = vsyncpa %s414, 1

</llo_original>
